<compile_context>
chip_gen: v6e
topology: v6e:2x2x1
jax: 0.10.0
libtpu: 0.0.40
codegen_flags: <defaults>
</compile_context>

<pallas_src>
import functools
import math

import jax
import jax.numpy as jnp
from jax import lax
from jax.experimental import pallas as pl
from jax.experimental.pallas import tpu as pltpu

_NEG = -1e30  # "-inf" placeholder that stays finite through exp()


def _gelu_erf(x):
    # PyTorch nn.GELU() default = exact erf form; erf via Abramowitz-Stegun 7.1.26
    # (max abs err ~1.5e-7), using only exp / mul / add (VPU + EUP friendly).
    a1, a2, a3, a4, a5 = 0.254829592, -0.284496736, 1.421413741, -1.453152027, 1.061405429
    p = 0.3275911
    z = x * 0.7071067811865476
    az = jnp.abs(z)
    t = 1.0 / (1.0 + p * az)
    poly = ((((a5 * t + a4) * t + a3) * t + a2) * t + a1) * t
    erf_abs = 1.0 - poly * jnp.exp(-az * az)
    erf = jnp.where(z >= 0.0, erf_abs, -erf_abs)
    return 0.5 * x * (1.0 + erf)


# ---------------------------------------------------------------------------
# Kernel 1: node prep — input_linear + fused (u|v) attention linear, tiled over nodes.
# ---------------------------------------------------------------------------
def _node_prep_kernel(x_ref, w_in_ref, b_in_ref, w_uv_ref, b_uv_ref, xlin_ref, suv_ref):
    f32 = jnp.float32
    xl = jnp.dot(x_ref[...], w_in_ref[...], preferred_element_type=f32) + b_in_ref[...]
    xlin_ref[...] = xl
    # fused attn_linear_u / attn_linear_v : one [dim, 2H] matmul
    suv_ref[...] = jnp.dot(xl, w_uv_ref[...], preferred_element_type=f32) + b_uv_ref[...]


# ---------------------------------------------------------------------------
# Kernel 2: per-destination-tile attention (gather + masked softmax + message) + FFN.
# ---------------------------------------------------------------------------
def _attn_ffn_kernel(
    nbr_ref,                                   # SMEM scalar prefetch: nbr_src flat [N*K] int32
    xlin_full_ref, suv_full_ref,               # VMEM-resident node tables [N,dim], [N,2H]
    xlin_tile_ref, sv_tile_ref,                # this tile's x_lin [Tn,dim] and s_v [Tn,H]
    mask_ref, ef_ref,                          # [Tn,K] slot mask, [Tn,2K] padded edge feats
    w_ef_ref, b_ef_ref,                        # folded edge linear, block-diag [2K,KH], [1,KH]
    w_f1x_ref, w_f1m_ref, b_f1_ref,            # FFN layer 1 (split for the concat input)
    w_f2_ref, b_f2_ref,                        # FFN layer 2
    out_ref,
    xg_ref, sug_ref,                           # VMEM scratch: gathered x_lin / s_uv rows
    *, num_heads, max_deg, tile_n,
):
    f32 = jnp.float32
    H, K, Tn = num_heads, max_deg, tile_n
    dim = xlin_tile_ref.shape[1]
    head_dim = dim // H

    # ---- index-based neighbour gather (scalar-prefetched indices, dynamic row copies) ----
    base = pl.program_id(0) * (Tn * K)

    def gather_body(e, carry):
        i = e // K                    # destination row within the tile
        k = e - i * K                 # neighbour slot
        src = nbr_ref[base + e]       # global source-node index (SMEM read)
        row = k * Tn + i              # slot-major layout in the scratch buffers
        xg_ref[pl.ds(row, 1), :] = xlin_full_ref[pl.ds(src, 1), :]
        sug_ref[pl.ds(row, 1), :] = suv_full_ref[pl.ds(src, 1), :]
        return carry

    lax.fori_loop(0, Tn * K, gather_body, 0)

    xg = xg_ref[...]                  # [K*Tn, dim]
    sug = sug_ref[...]                # [K*Tn, 2H]
    s_v = sv_tile_ref[...]            # [Tn, H]    (destination-side scores)
    mask = mask_ref[...]              # [Tn, K]

    # folded edge_linear -> attn_edges for all K slots in one matmul (block-diagonal weight)
    s_e_all = (jnp.dot(ef_ref[...], w_ef_ref[...], preferred_element_type=f32)
               + b_ef_ref[...])       # [Tn, K*H], columns slot-major

    # ---- per-destination edge_softmax over the K incoming-edge slots (all heads at once) ----
    masked = []
    for k in range(K):
        sc = sug[k * Tn:(k + 1) * Tn, 0:H] + s_v + s_e_all[:, k * H:(k + 1) * H]   # [Tn, H]
        sc = jnp.where(sc >= 0.0, sc, 0.2 * sc)                                    # LeakyReLU(0.2)
        masked.append(jnp.where(mask[:, k:k + 1] > 0.5, sc, _NEG))
    m = masked[0]
    for k in range(1, K):
        m = jnp.maximum(m, masked[k])                                              # per-dst max

    probs = []
    denom = jnp.zeros((Tn, H), f32)
    for k in range(K):
        p_k = jnp.where(mask[:, k:k + 1] > 0.5, jnp.exp(masked[k] - m), 0.0)
        probs.append(p_k)
        denom = denom + p_k
    # zero in-degree nodes: denom==0 -> message 0 (matches DGL segment-sum semantics)
    inv = 1.0 / jnp.where(denom > 0.0, denom, 1.0)   # exact divide (tolerance margin);
                                                     # pl.reciprocal(..., approx=True) is a
                                                     # drop-in if looser accuracy is OK.

    # ---- message = sum_k probs_k (replicated per head on the VPU) * x_lin[src_k] ----
    msg = jnp.zeros((Tn, dim), f32)
    for k in range(K):
        w_k = probs[k] * inv                                        # [Tn, H]
        w_rep = jnp.concatenate([w_k] * head_dim, axis=1)           # [Tn, dim]; col d*H+h -> head h
        msg = msg + w_rep * xg[k * Tn:(k + 1) * Tn, :]

    # ---- FeedForwardModule on concat([x_lin, message]) (dropout = eval identity) ----
    x_lin = xlin_tile_ref[...]
    h1 = (jnp.dot(x_lin, w_f1x_ref[...], preferred_element_type=f32)
          + jnp.dot(msg, w_f1m_ref[...], preferred_element_type=f32)
          + b_f1_ref[...])
    h1 = _gelu_erf(h1)
    out_ref[...] = jnp.dot(h1, w_f2_ref[...], preferred_element_type=f32) + b_f2_ref[...]


# ---------------------------------------------------------------------------
# Wrapper
# ---------------------------------------------------------------------------
def dgat_sep_forward(x, edge_feat, src, dst, params, *, dim, num_heads, tile_n=None):
    assert dim % num_heads == 0
    f32 = jnp.float32
    N = x.shape[0]
    E = src.shape[0]
    H = num_heads
    hidden = params["w_f1"].shape[0]

    if tile_n is None:
        tile_n = min(N, 128)
    assert N % tile_n == 0 and tile_n % 8 == 0
    # NOTE: for realistic sizes keep (2*K*tile_n*dim + resident tables) * 4B under ~24-28 MiB on
    # v7x (64 MiB VMEM) and under ~2x that on v5e/v6e; the toy problem is far below either.

    # ---- graph preprocessing (host/XLA): padded per-destination neighbour lists ----
    src = src.astype(jnp.int32)
    dst = dst.astype(jnp.int32)
    deg = jnp.zeros((N,), jnp.int32).at[dst].add(1)
    K = max(int(jnp.max(deg)), 1)                     # max in-degree (padding width)
    order = jnp.argsort(dst)
    dst_s, src_s = dst[order], src[order]
    offsets = jnp.concatenate([jnp.zeros((1,), jnp.int32), jnp.cumsum(deg)[:-1]])
    slot = jnp.arange(E, dtype=jnp.int32) - offsets[dst_s]
    nbr_src = jnp.zeros((N, K), jnp.int32).at[dst_s, slot].set(src_s)
    nbr_mask = jnp.zeros((N, K), f32).at[dst_s, slot].set(1.0)
    nbr_efeat = jnp.zeros((N, K, 2), f32).at[dst_s, slot].set(edge_feat[order].astype(f32))
    nbr_efeat = nbr_efeat.reshape(N, K * 2)           # columns slot-major: col 2k+c

    # ---- parameter folding / fusion (exact algebra, done once) ----
    w_in_t = params["w_in"].T
    b_in = params["b_in"][None, :]
    w_uv = jnp.concatenate([params["w_u"].T, params["w_v"].T], axis=1)        # [dim, 2H]
    b_uv = jnp.concatenate([params["b_u"], jnp.zeros((H,), f32)])[None, :]    # [1, 2H]
    w_ef = (params["w_ae"] @ params["w_e"]).T                                 # edge_linear∘attn_edges
    b_ef = params["w_ae"] @ params["b_e"] + params["b_ae"]                    # [H]
    w_ef_big = jnp.kron(jnp.eye(K, dtype=f32), w_ef)                          # [2K, K*H] block-diag
    b_ef_big = jnp.tile(b_ef, K)[None, :]                                     # [1, K*H]
    w_f1_t = params["w_f1"].T                                                 # [2*dim, hidden]
    w_f1x, w_f1m = w_f1_t[:dim], w_f1_t[dim:]
    b_f1 = params["b_f1"][None, :]
    w_f2_t = params["w_f2"].T
    b_f2 = params["b_f2"][None, :]

    cparams = pltpu.CompilerParams(
        dimension_semantics=("parallel",),            # node tiles split across TCs (v7x megacore)
        vmem_limit_bytes=32 * 1024 * 1024,
    )

    # ---- kernel 1: node prep ----
    x_lin, s_uv = pl.pallas_call(
        _node_prep_kernel,
        out_shape=(jax.ShapeDtypeStruct((N, dim), f32),
                   jax.ShapeDtypeStruct((N, 2 * H), f32)),
        grid=(N // tile_n,),
        in_specs=[
            pl.BlockSpec((tile_n, dim), lambda i: (i, 0)),
            pl.BlockSpec((dim, dim), lambda i: (0, 0)),
            pl.BlockSpec((1, dim), lambda i: (0, 0)),
            pl.BlockSpec((dim, 2 * H), lambda i: (0, 0)),
            pl.BlockSpec((1, 2 * H), lambda i: (0, 0)),
        ],
        out_specs=(pl.BlockSpec((tile_n, dim), lambda i: (i, 0)),
                   pl.BlockSpec((tile_n, 2 * H), lambda i: (i, 0))),
        compiler_params=cparams,
    )(x.astype(f32), w_in_t, b_in, w_uv, b_uv)

    s_v = s_uv[:, H:]   # destination-side ("v") scores, sliced once on the host side

    # ---- kernel 2: attention + message + FFN, tiled over destination nodes ----
    kernel2 = functools.partial(_attn_ffn_kernel, num_heads=H, max_deg=K, tile_n=tile_n)
    grid_spec = pltpu.PrefetchScalarGridSpec(
        num_scalar_prefetch=1,                        # nbr_src indices -> SMEM
        grid=(N // tile_n,),
        in_specs=[
            pl.BlockSpec((N, dim), lambda i, nbr: (0, 0)),        # x_lin table (resident)
            pl.BlockSpec((N, 2 * H), lambda i, nbr: (0, 0)),      # s_uv table (resident)
            pl.BlockSpec((tile_n, dim), lambda i, nbr: (i, 0)),   # x_lin tile (for FFN)
            pl.BlockSpec((tile_n, H), lambda i, nbr: (i, 0)),     # s_v tile
            pl.BlockSpec((tile_n, K), lambda i, nbr: (i, 0)),     # slot mask
            pl.BlockSpec((tile_n, 2 * K), lambda i, nbr: (i, 0)), # padded edge feats
            pl.BlockSpec((2 * K, K * H), lambda i, nbr: (0, 0)),
            pl.BlockSpec((1, K * H), lambda i, nbr: (0, 0)),
            pl.BlockSpec((dim, hidden), lambda i, nbr: (0, 0)),
            pl.BlockSpec((dim, hidden), lambda i, nbr: (0, 0)),
            pl.BlockSpec((1, hidden), lambda i, nbr: (0, 0)),
            pl.BlockSpec((hidden, dim), lambda i, nbr: (0, 0)),
            pl.BlockSpec((1, dim), lambda i, nbr: (0, 0)),
        ],
        out_specs=pl.BlockSpec((tile_n, dim), lambda i, nbr: (i, 0)),
        scratch_shapes=[pltpu.VMEM((K * tile_n, dim), f32),
                        pltpu.VMEM((K * tile_n, 2 * H), f32)],
    )
    out = pl.pallas_call(
        kernel2,
        grid_spec=grid_spec,
        out_shape=jax.ShapeDtypeStruct((N, dim), f32),
        compiler_params=cparams,
    )(nbr_src.reshape(-1), x_lin, s_uv, x_lin, s_v, nbr_mask, nbr_efeat,
      w_ef_big, b_ef_big, w_f1x, w_f1m, b_f1, w_f2_t, b_f2)
    return out


# ---------------------------------------------------------------------------
# Pure-JAX reference (mirrors the PyTorch/DGL forward, eval mode)
# ---------------------------------------------------------------------------
def dgat_sep_reference(x, edge_feat, src, dst, params, *, dim, num_heads):
    N = x.shape[0]
    head_dim = dim // num_heads
    x_lin = x @ params["w_in"].T + params["b_in"]
    e_attr = edge_feat @ params["w_e"].T + params["b_e"]
    s_u = x_lin @ params["w_u"].T + params["b_u"]
    s_v = x_lin @ params["w_v"].T
    s_e = e_attr @ params["w_ae"].T + params["b_ae"]
    scores = s_u[src] + s_v[dst] + s_e
    scores = jnp.where(scores >= 0.0, scores, 0.2 * scores)
    m = jax.ops.segment_max(scores, dst, num_segments=N)
    exp_s = jnp.exp(scores - m[dst])
    denom = jax.ops.segment_sum(exp_s, dst, num_segments=N)
    probs = exp_s / denom[dst]
    x3 = x_lin.reshape(N, head_dim, num_heads)
    msg = jax.ops.segment_sum(x3[src] * probs[:, None, :], dst, num_segments=N)
    msg = msg.reshape(N, dim)
    h = jnp.concatenate([x_lin, msg], axis=1)
    h = jax.nn.gelu(h @ params["w_f1"].T + params["b_f1"], approximate=False)
    return h @ params["w_f2"].T + params["b_f2"]


def init_params(key, dim, num_heads, hidden_dim_multiplier):
    hidden = dim * hidden_dim_multiplier
    ks = jax.random.split(key, 13)

    def w(k, o, i):
        return jax.random.normal(k, (o, i), jnp.float32) / math.sqrt(i)

    def b(k, o):
        return 0.1 * jax.random.normal(k, (o,), jnp.float32)

    return dict(
        w_in=w(ks[0], dim, dim), b_in=b(ks[1], dim),
        w_e=w(ks[2], dim, 2), b_e=b(ks[3], dim),
        w_u=w(ks[4], num_heads, dim), b_u=b(ks[5], num_heads),
        w_v=w(ks[6], num_heads, dim),
        w_ae=w(ks[7], num_heads, dim), b_ae=b(ks[8], num_heads),
        w_f1=w(ks[9], hidden, 2 * dim), b_f1=b(ks[10], hidden),
        w_f2=w(ks[11], dim, hidden), b_f2=b(ks[12], dim),
    )


if __name__ == "__main__":
    dim, num_heads, hidden_dim_multiplier = 32, 4, 2
    N = 16                         # nodes
    key = jax.random.PRNGKey(0)
    k_x, k_e, k_p = jax.random.split(key, 3)

    # synthetic graph: node v receives edges from (v+1)%N, (v+2)%N, (v+5)%N
    dst = jnp.repeat(jnp.arange(N, dtype=jnp.int32), 3)
    off = jnp.tile(jnp.array([1, 2, 5], dtype=jnp.int32), N)
    src = (dst + off) % N
    E = int(src.shape[0])          # 48 edges

    x = jax.random.normal(k_x, (N, dim), jnp.float32)
    edge_feat = jax.random.normal(k_e, (E, 2), jnp.float32)
    params = init_params(k_p, dim, num_heads, hidden_dim_multiplier)

    out = dgat_sep_forward(x, edge_feat, src, dst, params,
                           dim=dim, num_heads=num_heads, tile_n=8)
    out = jax.block_until_ready(out)

    ref = dgat_sep_reference(x, edge_feat, src, dst, params, dim=dim, num_heads=num_heads)
    assert out.shape == (N, dim)
    assert bool(jnp.all(jnp.isfinite(out)))
    assert bool(jnp.allclose(out, ref, atol=1e-3, rtol=1e-3))
    print("KERNEL_OK")
</pallas_src>

<mosaic_0001>
module attributes {stable_mosaic.version = 11 : i64} {
  func.func @_node_prep_kernel(%arg0: i32, %arg1: memref<8x32xf32, #tpu.memory_space<vmem>>, %arg2: memref<32x32xf32, #tpu.memory_space<vmem>>, %arg3: memref<1x32xf32, #tpu.memory_space<vmem>>, %arg4: memref<32x8xf32, #tpu.memory_space<vmem>>, %arg5: memref<1x8xf32, #tpu.memory_space<vmem>>, %arg6: memref<8x32xf32, #tpu.memory_space<vmem>>, %arg7: memref<8x8xf32, #tpu.memory_space<vmem>>) attributes {dimension_semantics = [#tpu.dimension_semantics<parallel>], iteration_bounds = array<i64: 2>, scalar_prefetch = 0 : i64, scratch_operands = 0 : i64, tpu.core_type = #tpu.core_type<tc>, window_params = [{transform_indices = @transform_0, window_bounds = array<i64: 8, 32>}, {pipeline_mode = #tpu.pipeline_mode<synchronous>, transform_indices = @transform_1, window_bounds = array<i64: 32, 32>}, {pipeline_mode = #tpu.pipeline_mode<synchronous>, transform_indices = @transform_2, window_bounds = array<i64: 1, 32>}, {pipeline_mode = #tpu.pipeline_mode<synchronous>, transform_indices = @transform_3, window_bounds = array<i64: 32, 8>}, {pipeline_mode = #tpu.pipeline_mode<synchronous>, transform_indices = @transform_4, window_bounds = array<i64: 1, 8>}, {transform_indices = @transform_5, window_bounds = array<i64: 8, 32>}, {transform_indices = @transform_6, window_bounds = array<i64: 8, 8>}]} {
    %c0 = arith.constant 0 : index
    %c0_0 = arith.constant 0 : index
    %0 = vector.load %arg1[%c0, %c0_0] : memref<8x32xf32, #tpu.memory_space<vmem>>, vector<8x32xf32>
    %c0_1 = arith.constant 0 : index
    %c0_2 = arith.constant 0 : index
    %1 = vector.load %arg2[%c0_1, %c0_2] : memref<32x32xf32, #tpu.memory_space<vmem>>, vector<32x32xf32>
    %cst = arith.constant dense<0.000000e+00> : vector<8x32xf32>
    %2 = tpu.matmul %0, %1, %cst {dimension_numbers = #tpu.dot_dimension_numbers<[1], [0], [0], [1], [0, 0, 1, 1], [], []>} : vector<8x32xf32>, vector<32x32xf32>, vector<8x32xf32> -> vector<8x32xf32>
    %c0_3 = arith.constant 0 : index
    %c0_4 = arith.constant 0 : index
    %3 = vector.load %arg3[%c0_3, %c0_4] : memref<1x32xf32, #tpu.memory_space<vmem>>, vector<1x32xf32>
    %4 = vector.broadcast %3 : vector<1x32xf32> to vector<8x32xf32>
    %5 = arith.addf %2, %4 : vector<8x32xf32>
    %c0_5 = arith.constant 0 : index
    %c0_6 = arith.constant 0 : index
    %6 = vector.load %arg6[%c0_5, %c0_6] : memref<8x32xf32, #tpu.memory_space<vmem>>, vector<8x32xf32>
    tpu.vector_store %arg6[%c0_5, %c0_6], %5 {strides = array<i32>} : memref<8x32xf32, #tpu.memory_space<vmem>>, vector<8x32xf32>,
    %c0_7 = arith.constant 0 : index
    %c0_8 = arith.constant 0 : index
    %7 = vector.load %arg4[%c0_7, %c0_8] : memref<32x8xf32, #tpu.memory_space<vmem>>, vector<32x8xf32>
    %cst_9 = arith.constant dense<0.000000e+00> : vector<8x8xf32>
    %8 = tpu.matmul %5, %7, %cst_9 {dimension_numbers = #tpu.dot_dimension_numbers<[1], [0], [0], [1], [0, 0, 1, 1], [], []>} : vector<8x32xf32>, vector<32x8xf32>, vector<8x8xf32> -> vector<8x8xf32>
    %c0_10 = arith.constant 0 : index
    %c0_11 = arith.constant 0 : index
    %9 = vector.load %arg5[%c0_10, %c0_11] : memref<1x8xf32, #tpu.memory_space<vmem>>, vector<1x8xf32>
    %10 = vector.broadcast %9 : vector<1x8xf32> to vector<8x8xf32>
    %11 = arith.addf %8, %10 : vector<8x8xf32>
    %c0_12 = arith.constant 0 : index
    %c0_13 = arith.constant 0 : index
    %12 = vector.load %arg7[%c0_12, %c0_13] : memref<8x8xf32, #tpu.memory_space<vmem>>, vector<8x8xf32>
    tpu.vector_store %arg7[%c0_12, %c0_13], %11 {strides = array<i32>} : memref<8x8xf32, #tpu.memory_space<vmem>>, vector<8x8xf32>,
    return
  }
  func.func @transform_0(%arg0: i32) -> (i32, i32) {
    %c0_i32 = arith.constant 0 : i32
    %c0_i32_0 = arith.constant 0 : i32
    return %arg0, %c0_i32 : i32, i32
  }
  func.func @transform_1(%arg0: i32) -> (i32, i32) {
    %c0_i32 = arith.constant 0 : i32
    %c0_i32_0 = arith.constant 0 : i32
    %c0_i32_1 = arith.constant 0 : i32
    return %c0_i32, %c0_i32_0 : i32, i32
  }
  func.func @transform_2(%arg0: i32) -> (i32, i32) {
    %c0_i32 = arith.constant 0 : i32
    %c0_i32_0 = arith.constant 0 : i32
    %c0_i32_1 = arith.constant 0 : i32
    return %c0_i32, %c0_i32_0 : i32, i32
  }
  func.func @transform_3(%arg0: i32) -> (i32, i32) {
    %c0_i32 = arith.constant 0 : i32
    %c0_i32_0 = arith.constant 0 : i32
    %c0_i32_1 = arith.constant 0 : i32
    return %c0_i32, %c0_i32_0 : i32, i32
  }
  func.func @transform_4(%arg0: i32) -> (i32, i32) {
    %c0_i32 = arith.constant 0 : i32
    %c0_i32_0 = arith.constant 0 : i32
    %c0_i32_1 = arith.constant 0 : i32
    return %c0_i32, %c0_i32_0 : i32, i32
  }
  func.func @transform_5(%arg0: i32) -> (i32, i32) {
    %c0_i32 = arith.constant 0 : i32
    %c0_i32_0 = arith.constant 0 : i32
    return %arg0, %c0_i32 : i32, i32
  }
  func.func @transform_6(%arg0: i32) -> (i32, i32) {
    %c0_i32 = arith.constant 0 : i32
    %c0_i32_0 = arith.constant 0 : i32
    return %arg0, %c0_i32 : i32, i32
  }
}

</mosaic_0001>

<llo_original>
// kernel: tpu_custom_call.1
$region0: #{tpu_custom_call.1}
  #allocation0 [shape = 'u32[]', space=smem, size = 0x4, offset = 0x4, fixed_abs, tag = 'smem constant byte address 0x4 - core index']
  #allocation1 [shape = 'u32[144,128]{1,0:T(1,128)}', space=vmem, size = 0x12000, scoped, tag = 'internal scratch']
  %s0 = inlined_call_operand.hbm [shape: f32[16,32], index: 0, kind: input, shape index: {}]
  %s1 = inlined_call_operand.vmem [shape: f32[32,32], index: 1, kind: input, shape index: {}]
  %s2 = inlined_call_operand.vmem [shape: f32[1,32], index: 2, kind: input, shape index: {}]
  %s3 = inlined_call_operand.vmem [shape: f32[32,8], index: 3, kind: input, shape index: {}]
  %s4 = inlined_call_operand.vmem [shape: f32[1,8], index: 4, kind: input, shape index: {}]
  %s5 = inlined_call_operand.hbm [shape: f32[16,32], index: 5, kind: output, shape index: {0}]
  %s6 = inlined_call_operand.vmem [shape: f32[16,8], index: 6, kind: output, shape index: {1}]
  %7 = xla_tuple %s5, %s6
  %s8 = sld [smem:[#allocation0]]
  $region65: #{tpu_custom_call.1} parent=0
    _
  %s10 = ssub.s32 1, %s8
  %s11 = scalar_select 0, %s10, %s8
  $region1: #{tpu_custom_call.1} parent=0
    #allocation2 [shape = 'u8[8192]{0}', space=vmem, size = 0x2000, scoped, tag = 'input window, operand 0']
    #allocation3 [shape = 's32[2]{0}', space=sflag, size = 0x8, scoped, tag = 'scoped memory for tpu_custom_call.1']
    #allocation4 [shape = 's32[2]{0}', space=sflag, size = 0x8, scoped, tag = 'scoped memory for tpu_custom_call.1']
    #allocation5 [shape = 'u8[8192]{0}', space=vmem, size = 0x2000, scoped, tag = 'output window, operand 0']
    %12 = vsyncpa [#allocation3], 0
    %s13 = scalar_lea.sflag [#allocation3], 1
    %14 = vsyncpa %s13, 0
    %15 = vsyncpa [#allocation4], 0
    %s16 = scalar_lea.sflag [#allocation4], 1
    %17 = vsyncpa %s16, 0
    loop: start=0, step=1, limit=4
    $region2: #{tpu_custom_call.1} parent=1 // loop_pre_header
      _
    $region3: #{tpu_custom_call.1} parent=1 // loop_header
      %s19 = sphi 0, %s23
      %p20 = scmp.ge.s32.totalorder %s19, 4
      %s29 = sphi 0, %s31
      %s32 = sphi 0, %s29
      %s33 = sphi 0, %s32
      %s49 = sphi 0, %s33
      %s53 = sphi 0, %s53
      %s55 = sphi 0, %s53
      %s56 = sphi 0, %s55
      %s70 = sphi 0, %s56
      %s74 = sphi 0, %s74
      %s76 = sphi 0, %s74
      %s77 = sphi 0, %s76
      %s91 = sphi 0, %s77
      %s95 = sphi 0, %s95
      %s97 = sphi 0, %s95
      %s98 = sphi 0, %s97
      %s112 = sphi 0, %s98
      %s116 = sphi 0, %s116
      %s118 = sphi 0, %s116
      %s119 = sphi 0, %s118
      %s133 = sphi 0, %s119
      %s139 = sphi 0, %s141
      %s142 = sphi 0, %s139
      %s143 = sphi 0, %s142
      %s159 = sphi 0, %s143
      %s165 = sphi 0, %s167
      %s168 = sphi 0, %s165
      %s169 = sphi 0, %s168
      %s185 = sphi 0, %s169
    $region4: #{tpu_custom_call.1} parent=1 // loop_header_branch
      %22 = sbr.rel (%p20) target = $region8
    $region5: #{tpu_custom_call.1} parent=1 // loop_body
      %s24 = ssub.s32 %s19, 1
      %s25 = ssub.s32 %s19, 2
      %s26 = sadd.s32 %s19, 1
      %s27 = ssub.s32 %s19, %s26
      %p28 = scmp.eq.s32.totalorder %s27, 0
      %s30 = sadd.s32 %s29, 1
      %s31 = scalar_select %p28, %s29, %s30
      %p34 = pneg %p28
      %p35 = scmp.eq.s32.totalorder %s19, 1
      %p36 = por %p34, %p35
      %p37 = scmp.ne.s32.totalorder %s29, %s32
      %p38 = scmp.eq.s32.totalorder %s19, 0
      %p39 = por %p37, %p38
      %p40 = scmp.ne.s32.totalorder %s29, %s32
      %p41 = scmp.eq.s32.totalorder %s24, 1
      %p42 = por %p40, %p41
      %p43 = scmp.ne.s32.totalorder %s32, %s33
      %p44 = scmp.eq.s32.totalorder %s24, 0
      %p45 = por %p43, %p44
      %p46 = scmp.ne.s32.totalorder %s32, %s33
      %p47 = scmp.eq.s32.totalorder %s25, 1
      %p48 = por %p46, %p47
      %p50 = scmp.ne.s32.totalorder %s33, %s49
      %p51 = scmp.eq.s32.totalorder %s25, 0
      %p52 = por %p50, %p51
      %s54 = sadd.s32 %s53, 1
      %p57 = scmp.eq.s32.totalorder %s19, 1
      %p58 = scmp.ne.s32.totalorder %s53, %s55
      %p59 = scmp.eq.s32.totalorder %s19, 0
      %p60 = por %p58, %p59
      %p61 = scmp.ne.s32.totalorder %s53, %s55
      %p62 = scmp.eq.s32.totalorder %s24, 1
      %p63 = por %p61, %p62
      %p64 = scmp.ne.s32.totalorder %s55, %s56
      %p65 = scmp.eq.s32.totalorder %s24, 0
      %p66 = por %p64, %p65
      %p67 = scmp.ne.s32.totalorder %s55, %s56
      %p68 = scmp.eq.s32.totalorder %s25, 1
      %p69 = por %p67, %p68
      %p71 = scmp.ne.s32.totalorder %s56, %s70
      %p72 = scmp.eq.s32.totalorder %s25, 0
      %p73 = por %p71, %p72
      %s75 = sadd.s32 %s74, 1
      %p78 = scmp.eq.s32.totalorder %s19, 1
      %p79 = scmp.ne.s32.totalorder %s74, %s76
      %p80 = scmp.eq.s32.totalorder %s19, 0
      %p81 = por %p79, %p80
      %p82 = scmp.ne.s32.totalorder %s74, %s76
      %p83 = scmp.eq.s32.totalorder %s24, 1
      %p84 = por %p82, %p83
      %p85 = scmp.ne.s32.totalorder %s76, %s77
      %p86 = scmp.eq.s32.totalorder %s24, 0
      %p87 = por %p85, %p86
      %p88 = scmp.ne.s32.totalorder %s76, %s77
      %p89 = scmp.eq.s32.totalorder %s25, 1
      %p90 = por %p88, %p89
      %p92 = scmp.ne.s32.totalorder %s77, %s91
      %p93 = scmp.eq.s32.totalorder %s25, 0
      %p94 = por %p92, %p93
      %s96 = sadd.s32 %s95, 1
      %p99 = scmp.eq.s32.totalorder %s19, 1
      %p100 = scmp.ne.s32.totalorder %s95, %s97
      %p101 = scmp.eq.s32.totalorder %s19, 0
      %p102 = por %p100, %p101
      %p103 = scmp.ne.s32.totalorder %s95, %s97
      %p104 = scmp.eq.s32.totalorder %s24, 1
      %p105 = por %p103, %p104
      %p106 = scmp.ne.s32.totalorder %s97, %s98
      %p107 = scmp.eq.s32.totalorder %s24, 0
      %p108 = por %p106, %p107
      %p109 = scmp.ne.s32.totalorder %s97, %s98
      %p110 = scmp.eq.s32.totalorder %s25, 1
      %p111 = por %p109, %p110
      %p113 = scmp.ne.s32.totalorder %s98, %s112
      %p114 = scmp.eq.s32.totalorder %s25, 0
      %p115 = por %p113, %p114
      %s117 = sadd.s32 %s116, 1
      %p120 = scmp.eq.s32.totalorder %s19, 1
      %p121 = scmp.ne.s32.totalorder %s116, %s118
      %p122 = scmp.eq.s32.totalorder %s19, 0
      %p123 = por %p121, %p122
      %p124 = scmp.ne.s32.totalorder %s116, %s118
      %p125 = scmp.eq.s32.totalorder %s24, 1
      %p126 = por %p124, %p125
      %p127 = scmp.ne.s32.totalorder %s118, %s119
      %p128 = scmp.eq.s32.totalorder %s24, 0
      %p129 = por %p127, %p128
      %p130 = scmp.ne.s32.totalorder %s118, %s119
      %p131 = scmp.eq.s32.totalorder %s25, 1
      %p132 = por %p130, %p131
      %p134 = scmp.ne.s32.totalorder %s119, %s133
      %p135 = scmp.eq.s32.totalorder %s25, 0
      %p136 = por %p134, %p135
      %s137 = ssub.s32 %s19, %s26
      %p138 = scmp.eq.s32.totalorder %s137, 0
      %s140 = sadd.s32 %s139, 1
      %s141 = scalar_select %p138, %s139, %s140
      %p144 = pneg %p138
      %p145 = scmp.eq.s32.totalorder %s19, 1
      %p146 = por %p144, %p145
      %p147 = scmp.ne.s32.totalorder %s139, %s142
      %p148 = scmp.eq.s32.totalorder %s19, 0
      %p149 = por %p147, %p148
      %p150 = scmp.ne.s32.totalorder %s139, %s142
      %p151 = scmp.eq.s32.totalorder %s24, 1
      %p152 = por %p150, %p151
      %p153 = scmp.ne.s32.totalorder %s142, %s143
      %p154 = scmp.eq.s32.totalorder %s24, 0
      %p155 = por %p153, %p154
      %p156 = scmp.ne.s32.totalorder %s142, %s143
      %p157 = scmp.eq.s32.totalorder %s25, 1
      %p158 = por %p156, %p157
      %p160 = scmp.ne.s32.totalorder %s143, %s159
      %p161 = scmp.eq.s32.totalorder %s25, 0
      %p162 = por %p160, %p161
      %s163 = ssub.s32 %s19, %s26
      %p164 = scmp.eq.s32.totalorder %s163, 0
      %s166 = sadd.s32 %s165, 1
      %s167 = scalar_select %p164, %s165, %s166
      %p170 = pneg %p164
      %p171 = scmp.eq.s32.totalorder %s19, 1
      %p172 = por %p170, %p171
      %p173 = scmp.ne.s32.totalorder %s165, %s168
      %p174 = scmp.eq.s32.totalorder %s19, 0
      %p175 = por %p173, %p174
      %p176 = scmp.ne.s32.totalorder %s165, %s168
      %p177 = scmp.eq.s32.totalorder %s24, 1
      %p178 = por %p176, %p177
      %p179 = scmp.ne.s32.totalorder %s168, %s169
      %p180 = scmp.eq.s32.totalorder %s24, 0
      %p181 = por %p179, %p180
      %p182 = scmp.ne.s32.totalorder %s168, %s169
      %p183 = scmp.eq.s32.totalorder %s25, 1
      %p184 = por %p182, %p183
      %p186 = scmp.ne.s32.totalorder %s169, %s185
      %p187 = scmp.eq.s32.totalorder %s25, 0
      %p188 = por %p186, %p187
      %p189 = scmp.le.s32.totalorder 1, %s19
      %p190 = scmp.lt.s32.totalorder %s19, 3
      %p191 = pnand %p189, %p190
      %p192 = pneg %p191
      // Predicated region
      $region9: #{tpu_custom_call.1} parent=5 // pred_check
        _
      $region10: #{tpu_custom_call.1} parent=5 // pred_check_branch
        %194 = sbr.rel (%p191) target = $region12
      $region11: #{tpu_custom_call.1} parent=5 // pred_region
        %s195 = ssub.s32 %s19, 1
        // Predicated region
        $region13: #{tpu_custom_call.1} parent=11 // pred_check
          %p196 = pneg %p66
        $region14: #{tpu_custom_call.1} parent=11 // pred_check_branch
          %198 = sbr.rel (%p196) target = $region16
        $region15: #{tpu_custom_call.1} parent=11 // pred_region
          _
        $region16: #{tpu_custom_call.1} parent=11 // pred_fallthru
          _
        // Predicated region
        $region17: #{tpu_custom_call.1} parent=11 // pred_check
          %p199 = pneg %p87
        $region18: #{tpu_custom_call.1} parent=11 // pred_check_branch
          %201 = sbr.rel (%p199) target = $region20
        $region19: #{tpu_custom_call.1} parent=11 // pred_region
          _
        $region20: #{tpu_custom_call.1} parent=11 // pred_fallthru
          _
        // Predicated region
        $region21: #{tpu_custom_call.1} parent=11 // pred_check
          %p202 = pneg %p108
        $region22: #{tpu_custom_call.1} parent=11 // pred_check_branch
          %204 = sbr.rel (%p202) target = $region24
        $region23: #{tpu_custom_call.1} parent=11 // pred_region
          _
        $region24: #{tpu_custom_call.1} parent=11 // pred_fallthru
          _
        // Predicated region
        $region25: #{tpu_custom_call.1} parent=11 // pred_check
          %p205 = pneg %p129
        $region26: #{tpu_custom_call.1} parent=11 // pred_check_branch
          %207 = sbr.rel (%p205) target = $region28
        $region27: #{tpu_custom_call.1} parent=11 // pred_region
          _
        $region28: #{tpu_custom_call.1} parent=11 // pred_fallthru
          _
      $region12: #{tpu_custom_call.1} parent=5 // pred_fallthru
        _
      %p208 = scmp.lt.s32.totalorder %s19, 2
      // Predicated region
      $region29: #{tpu_custom_call.1} parent=5 // pred_check
        %p209 = pneg %p208
      $region30: #{tpu_custom_call.1} parent=5 // pred_check_branch
        %211 = sbr.rel (%p209) target = $region32
      $region31: #{tpu_custom_call.1} parent=5 // pred_region
        // Predicated region
        $region33: #{tpu_custom_call.1} parent=31 // pred_check
          %p212 = pneg %p39
        $region34: #{tpu_custom_call.1} parent=31 // pred_check_branch
          %214 = sbr.rel (%p212) target = $region36
        $region35: #{tpu_custom_call.1} parent=31 // pred_region
          %s215 = sand.u32 %s29, 1
          %s216 = scalar_lea.sflag [#allocation3], %s215
          %s217 = sand.u32 %s29, 1
          %s218 = smul.addr %s217, 8
          %s219 = scalar_lea.vmem [#allocation2], %s218
          %s221 = ssub.s32 128, 128
          %222 = vsyncadd %s216, %s221
          %s223 = smul.addr %s19, 128
          %s224 = scalar_lea.hbm %s0, %s223
          %s226 = sshll.u32 %s219, 4
          %s227 = int_to_ptr.vmem [resolvable:$true] %s226
          %229 = dma.hbm_to_vmem [thread:$0]  %s224, 128, %s227, %s216
        $region36: #{tpu_custom_call.1} parent=31 // pred_fallthru
          _
      $region32: #{tpu_custom_call.1} parent=5 // pred_fallthru
        _
      %p230 = scmp.le.s32.totalorder 1, %s19
      %p231 = scmp.lt.s32.totalorder %s19, 3
      %p232 = pnand %p230, %p231
      %p233 = pneg %p232
      // Predicated region
      $region37: #{tpu_custom_call.1} parent=5 // pred_check
        _
      $region38: #{tpu_custom_call.1} parent=5 // pred_check_branch
        %235 = sbr.rel (%p232) target = $region40
      $region39: #{tpu_custom_call.1} parent=5 // pred_region
        %s236 = ssub.s32 %s19, 1
        %s237 = sand.u32 %s32, 1
        %s238 = scalar_lea.sflag [#allocation3], %s237
        %s239 = sand.u32 %s32, 1
        %s240 = smul.addr %s239, 8
        %s241 = scalar_lea.vmem [#allocation2], %s240
        // Predicated region
        $region41: #{tpu_custom_call.1} parent=39 // pred_check
          %p242 = pneg %p45
        $region42: #{tpu_custom_call.1} parent=39 // pred_check_branch
          %244 = sbr.rel (%p242) target = $region44
        $region43: #{tpu_custom_call.1} parent=39 // pred_region
          %245 = dma.done %s238, 128
        $region44: #{tpu_custom_call.1} parent=39 // pred_fallthru
          _
        %s246 = sand.u32 %s32, 1
        %s247 = scalar_lea.sflag [#allocation3], %s246
        %s248 = sand.u32 %s32, 1
        %s249 = smul.addr %s248, 8
        %s250 = scalar_lea.vmem [#allocation2], %s249
        %p251 = pneg %p45
        %p252 = pneg %p42
        %p253 = pneg %p66
        %p254 = pneg %p63
        %p255 = pneg %p87
        %p256 = pneg %p84
        %p257 = pneg %p108
        %p258 = pneg %p105
        %p259 = pneg %p129
        %p260 = pneg %p126
        %p261 = pneg %p155
        %p262 = pneg %p152
        %s263 = sand.u32 %s142, 1
        %s264 = scalar_lea.sflag [#allocation4], %s263
        %s265 = sand.u32 %s142, 1
        %s266 = smul.addr %s265, 8
        %s267 = scalar_lea.vmem [#allocation5], %s266
        %p268 = pneg %p181
        %p269 = pneg %p178
        %p270 = scmp.lt.s32.totalorder %s24, 1
        %s271 = scalar_select %p270, %s24, 1
        %s272 = smul.addr %s271, 8
        %s273 = scalar_lea.vmem %s6, %s272
        %p274 = scmp.lt.s32.totalorder %s24, 1
        %s275 = scalar_select %p274, %s24, 1
        %s276 = smul.addr %s275, 8
        %s277 = scalar_lea.vmem %s6, %s276
        %v278 = vld [vmem:[%s241] sm:$0xff]
        %v279 = vld [vmem:[%s1] sm:$0xff]
        %v280 = vld [vmem:[%s1 + $0x8] sm:$0xff]
        %v281 = vld [vmem:[%s1 + $0x10] sm:$0xff]
        %v282 = vld [vmem:[%s1 + $0x18] sm:$0xff]
        %v283 = vld [vmem:[%s2] sm:$0x1]
        %v285 = vlaneseq
        %v286 = vshrl.u32 %v285, 7
        %v287 = vsub.s32 0, %v286
        %v288 = vrot.slane %v283, %v287
        %vm290 = vcmask 261120
        %v292 = vsel %vm290, %v278, 0
        %294 = vmatprep.subr.mxu0 0.0
        %295 = vmatpush1.msra.mxu0 0.0
        %296 = vmatprep.subr.mxu0 0.0
        %297 = vmatpush1.msra.mxu0 0.0
        %298 = vmatprep.subr.mxu0 0.0
        %299 = vmatpush1.msra.mxu0 0.0
        %300 = vmatprep.subr.mxu0 0.0
        %301 = vmatpush1.msra.mxu0 0.0
        %302 = vmatprep.subr.mxu0 0.0
        %303 = vmatpush1.msra.mxu0 0.0
        %304 = vmatprep.subr.mxu0 0.0
        %305 = vmatpush1.msra.mxu0 0.0
        %306 = vmatprep.subr.mxu0 0.0
        %307 = vmatpush1.msra.mxu0 0.0
        %308 = vmatprep.subr.mxu0 0.0
        %309 = vmatpush1.msra.mxu0 0.0
        %310 = vmatprep.subr.mxu0 0.0
        %311 = vmatpush1.msra.mxu0 0.0
        %312 = vmatprep.subr.mxu0 0.0
        %313 = vmatpush1.msra.mxu0 0.0
        %314 = vmatprep.subr.mxu0 0.0
        %315 = vmatpush1.msra.mxu0 0.0
        %316 = vmatprep.subr.mxu0 0.0
        %317 = vmatpush1.msra.mxu0 0.0
        %318 = vmatprep.subr.mxu0 0.0
        %319 = vmatpush1.msra.mxu0 %v282
        %320 = vmatprep.subr.mxu0 0.0
        %321 = vmatpush1.msra.mxu0 %v281
        %322 = vmatprep.subr.mxu0 0.0
        %323 = vmatpush1.msra.mxu0 %v280
        %324 = vmatprep.subr.mxu0 0.0
        %325 = vmatpush1.msra.mxu0 %v279
        %326 = vmatprep.subr.mxu0 0.0
        %327 = vmatpush2.msra.mxu0 0.0
        %328 = vmatprep.subr.mxu0 0.0
        %329 = vmatpush2.msra.mxu0 0.0
        %330 = vmatprep.subr.mxu0 0.0
        %331 = vmatpush2.msra.mxu0 0.0
        %332 = vmatprep.subr.mxu0 0.0
        %333 = vmatpush2.msra.mxu0 0.0
        %334 = vmatprep.subr.mxu0 0.0
        %335 = vmatpush2.msra.mxu0 0.0
        %336 = vmatprep.subr.mxu0 0.0
        %337 = vmatpush2.msra.mxu0 0.0
        %338 = vmatprep.subr.mxu0 0.0
        %339 = vmatpush2.msra.mxu0 0.0
        %340 = vmatprep.subr.mxu0 0.0
        %341 = vmatpush2.msra.mxu0 0.0
        %342 = vmatprep.subr.mxu0 0.0
        %343 = vmatpush2.msra.mxu0 0.0
        %344 = vmatprep.subr.mxu0 0.0
        %345 = vmatpush2.msra.mxu0 0.0
        %346 = vmatprep.subr.mxu0 0.0
        %347 = vmatpush2.msra.mxu0 0.0
        %348 = vmatprep.subr.mxu0 0.0
        %349 = vmatpush2.msra.mxu0 0.0
        %350 = vmatprep.subr.mxu0 0.0
        %351 = vmatpush2.msra.mxu0 0.0
        %352 = vmatprep.subr.mxu0 0.0
        %353 = vmatpush2.msra.mxu0 0.0
        %354 = vmatprep.subr.mxu0 0.0
        %355 = vmatpush2.msra.mxu0 0.0
        %356 = vmatprep.subr.mxu0 0.0
        %357 = vmatpush2.msra.mxu0 0.0
        %358 = vmatprep.mubr.f32.mxu0 0.0
        %359 = vmatmul.mubr.f32.gmra.mxu0 %v292
        %v360 = vpop.f32.mrf.mxu0
        %v361 = vadd.f32 %v288, %v360
        %v362 = vpop.f32.mrf.mxu0
        %363 = vdwg.mxu0
        %364 = vst.msk [vmem:[%s267] sm:$0xff] %vm290, %v361
        %v365 = vld [vmem:[%s3] sm:$0xff]
        %v366 = vld [vmem:[%s3 + $0x8] sm:$0xff]
        %v367 = vld [vmem:[%s3 + $0x10] sm:$0xff]
        %v368 = vld [vmem:[%s3 + $0x18] sm:$0xff]
        %v369 = vld [vmem:[%s4] sm:$0x1]
        %v371 = vlaneseq
        %v372 = vshrl.u32 %v371, 7
        %v373 = vsub.s32 0, %v372
        %v374 = vrot.slane %v369, %v373
        %v377 = vsel %vm290, %v361, 0
        %379 = vmatprep.subr.mxu0 0.0
        %380 = vmatpush1.msra.mxu0 0.0
        %381 = vmatprep.subr.mxu0 0.0
        %382 = vmatpush1.msra.mxu0 0.0
        %383 = vmatprep.subr.mxu0 0.0
        %384 = vmatpush1.msra.mxu0 0.0
        %385 = vmatprep.subr.mxu0 0.0
        %386 = vmatpush1.msra.mxu0 0.0
        %387 = vmatprep.subr.mxu0 0.0
        %388 = vmatpush1.msra.mxu0 0.0
        %389 = vmatprep.subr.mxu0 0.0
        %390 = vmatpush1.msra.mxu0 0.0
        %391 = vmatprep.subr.mxu0 0.0
        %392 = vmatpush1.msra.mxu0 0.0
        %393 = vmatprep.subr.mxu0 0.0
        %394 = vmatpush1.msra.mxu0 0.0
        %395 = vmatprep.subr.mxu0 0.0
        %396 = vmatpush1.msra.mxu0 0.0
        %397 = vmatprep.subr.mxu0 0.0
        %398 = vmatpush1.msra.mxu0 0.0
        %399 = vmatprep.subr.mxu0 0.0
        %400 = vmatpush1.msra.mxu0 0.0
        %401 = vmatprep.subr.mxu0 0.0
        %402 = vmatpush1.msra.mxu0 0.0
        %403 = vmatprep.subr.mxu0 0.0
        %404 = vmatpush1.msra.mxu0 %v368
        %405 = vmatprep.subr.mxu0 0.0
        %406 = vmatpush1.msra.mxu0 %v367
        %407 = vmatprep.subr.mxu0 0.0
        %408 = vmatpush1.msra.mxu0 %v366
        %409 = vmatprep.subr.mxu0 0.0
        %410 = vmatpush1.msra.mxu0 %v365
        %411 = vmatprep.subr.mxu0 0.0
        %412 = vmatpush2.msra.mxu0 0.0
        %413 = vmatprep.subr.mxu0 0.0
        %414 = vmatpush2.msra.mxu0 0.0
        %415 = vmatprep.subr.mxu0 0.0
        %416 = vmatpush2.msra.mxu0 0.0
        %417 = vmatprep.subr.mxu0 0.0
        %418 = vmatpush2.msra.mxu0 0.0
        %419 = vmatprep.subr.mxu0 0.0
        %420 = vmatpush2.msra.mxu0 0.0
        %421 = vmatprep.subr.mxu0 0.0
        %422 = vmatpush2.msra.mxu0 0.0
        %423 = vmatprep.subr.mxu0 0.0
        %424 = vmatpush2.msra.mxu0 0.0
        %425 = vmatprep.subr.mxu0 0.0
        %426 = vmatpush2.msra.mxu0 0.0
        %427 = vmatprep.subr.mxu0 0.0
        %428 = vmatpush2.msra.mxu0 0.0
        %429 = vmatprep.subr.mxu0 0.0
        %430 = vmatpush2.msra.mxu0 0.0
        %431 = vmatprep.subr.mxu0 0.0
        %432 = vmatpush2.msra.mxu0 0.0
        %433 = vmatprep.subr.mxu0 0.0
        %434 = vmatpush2.msra.mxu0 0.0
        %435 = vmatprep.subr.mxu0 0.0
        %436 = vmatpush2.msra.mxu0 0.0
        %437 = vmatprep.subr.mxu0 0.0
        %438 = vmatpush2.msra.mxu0 0.0
        %439 = vmatprep.subr.mxu0 0.0
        %440 = vmatpush2.msra.mxu0 0.0
        %441 = vmatprep.subr.mxu0 0.0
        %442 = vmatpush2.msra.mxu0 0.0
        %443 = vmatprep.mubr.f32.mxu0 0.0
        %444 = vmatmul.mubr.f32.gmra.mxu0 %v377
        %v445 = vpop.f32.mrf.mxu0
        %v446 = vadd.f32 %v374, %v445
        %v447 = vpop.f32.mrf.mxu0
        %448 = vdwg.mxu0
        %vm449 = vcmask 64512
        %450 = vst.msk [vmem:[%s277] sm:$0xff] %vm449, %v446
        %s451 = sand.u32 %s142, 1
        %s452 = scalar_lea.sflag [#allocation4], %s451
        %s453 = sand.u32 %s142, 1
        %s454 = smul.addr %s453, 8
        %s455 = scalar_lea.vmem [#allocation5], %s454
        %p456 = scmp.lt.s32.totalorder %s24, 1
        %s457 = scalar_select %p456, %s24, 1
        %s458 = smul.addr %s457, 8
        %s459 = scalar_lea.vmem %s6, %s458
        // Predicated region
        $region45: #{tpu_custom_call.1} parent=39 // pred_check
          %p460 = pneg %p152
        $region46: #{tpu_custom_call.1} parent=39 // pred_check_branch
          %462 = sbr.rel (%p460) target = $region48
        $region47: #{tpu_custom_call.1} parent=39 // pred_region
          %s464 = ssub.s32 128, 128
          %465 = vsyncadd %s452, %s464
          %s466 = smul.addr %s24, 128
          %s467 = scalar_lea.hbm %s5, %s466
          %s469 = sshll.u32 %s455, 4
          %s470 = int_to_ptr.vmem [resolvable:$true] %s469
          %472 = dma.vmem_to_hbm [thread:$0]  %s470, 128, %s467, %s452
        $region48: #{tpu_custom_call.1} parent=39 // pred_fallthru
          _
        // Predicated region
        $region49: #{tpu_custom_call.1} parent=39 // pred_check
          %p473 = pneg %p178
        $region50: #{tpu_custom_call.1} parent=39 // pred_check_branch
          %475 = sbr.rel (%p473) target = $region52
        $region51: #{tpu_custom_call.1} parent=39 // pred_region
          _
        $region52: #{tpu_custom_call.1} parent=39 // pred_fallthru
          _
      $region40: #{tpu_custom_call.1} parent=5 // pred_fallthru
        _
      %p476 = scmp.le.s32.totalorder 2, %s19
      // Predicated region
      $region53: #{tpu_custom_call.1} parent=5 // pred_check
        %p477 = pneg %p476
      $region54: #{tpu_custom_call.1} parent=5 // pred_check_branch
        %479 = sbr.rel (%p477) target = $region56
      $region55: #{tpu_custom_call.1} parent=5 // pred_region
        %s480 = ssub.s32 %s19, 2
        // Predicated region
        $region57: #{tpu_custom_call.1} parent=55 // pred_check
          %p481 = pneg %p158
        $region58: #{tpu_custom_call.1} parent=55 // pred_check_branch
          %483 = sbr.rel (%p481) target = $region60
        $region59: #{tpu_custom_call.1} parent=55 // pred_region
          %s484 = sand.u32 %s143, 1
          %s485 = scalar_lea.sflag [#allocation4], %s484
          %s486 = sand.u32 %s143, 1
          %s487 = smul.addr %s486, 8
          %s488 = scalar_lea.vmem [#allocation5], %s487
          %489 = dma.done %s485, 128
        $region60: #{tpu_custom_call.1} parent=55 // pred_fallthru
          _
        // Predicated region
        $region61: #{tpu_custom_call.1} parent=55 // pred_check
          %p490 = pneg %p184
        $region62: #{tpu_custom_call.1} parent=55 // pred_check_branch
          %492 = sbr.rel (%p490) target = $region64
        $region63: #{tpu_custom_call.1} parent=55 // pred_region
          %p493 = scmp.lt.s32.totalorder %s25, 1
          %s494 = scalar_select %p493, %s25, 1
          %s495 = smul.addr %s494, 8
          %s496 = scalar_lea.vmem %s6, %s495
        $region64: #{tpu_custom_call.1} parent=55 // pred_fallthru
          _
      $region56: #{tpu_custom_call.1} parent=5 // pred_fallthru
        _
    $region6: #{tpu_custom_call.1} parent=1 // loop_footer
      %s23 = sadd.s32 1, %s19
    $region7: #{tpu_custom_call.1} parent=1 // loop_footer_branch
      %18 = sbr.rel target = $region3
    $region8: #{tpu_custom_call.1} parent=1 // loop_exit
      _
    %497 = vsyncpa [#allocation3], 1
    %s498 = scalar_lea.sflag [#allocation3], 1
    %499 = vsyncpa %s498, 1
    %500 = vsyncpa [#allocation4], 1
    %s501 = scalar_lea.sflag [#allocation4], 1
    %502 = vsyncpa %s501, 1

</llo_original>
